<compile_context>
chip_gen: v7x
topology: tpu7x:2x2x1
jax: 0.10.0
libtpu: 0.0.40
codegen_flags: <defaults>
</compile_context>

<pallas_src>
import functools

import jax
import jax.numpy as jnp
from jax.experimental import pallas as pl
from jax.experimental.pallas import tpu as pltpu


def _bottleneck_kernel(x_ref, w_ref, b_ref, o_ref, patches_ref, *,
                       n_batch, c_in, kh_size, kw_size, stride,
                       w_padded, n_cols):
    """One batch-chunk per grid step.

    x_ref:       (Nb, Cin, Hp*Wp)         zero-padded, row-flattened input (VMEM)
    w_ref:       (Cout, KH*KW*Cin)        im2col-reshaped weights (VMEM)
    b_ref:       (Cout, 1)                f32 bias (VMEM)
    o_ref:       (Nb, Cout, n_cols)       lane-dense output, row pitch = Wp (VMEM)
    patches_ref: (KH*KW*Cin, n_cols)      im2col scratch (VMEM)

    Output column j = ho*Wp + wo holds conv output (ho, wo) for wo < Wout; the
    remaining (Wp - Wout) columns per row are junk and cropped by the wrapper.
    """
    span = stride * (n_cols - 1) + 1

    for n in range(n_batch):              # static; whole chunk is VMEM-resident
        x = x_ref[n]                      # (Cin, Hp*Wp)

        # im2col: each tap is ONE contiguous (stride=1) lane slice, written
        # once into the lane-dense scratch buffer.
        for kh in range(kh_size):
            for kw in range(kw_size):
                base = kh * w_padded + kw
                t = kh * kw_size + kw
                tap = x[:, base:base + span:stride]            # (Cin, n_cols)
                patches_ref[t * c_in:(t + 1) * c_in, :] = (
                    tap.astype(patches_ref.dtype))

        # Single MXU contraction: (Cout, K) x (K, n_cols) -> (Cout, n_cols).
        acc = jax.lax.dot_general(
            w_ref[...], patches_ref[...],
            dimension_numbers=(((1,), (0,)), ((), ())),
            preferred_element_type=jnp.float32)

        acc = acc + b_ref[...]                                 # f32 bias
        o_ref[n] = jnp.maximum(acc, 0.0).astype(o_ref.dtype)   # f32 ReLU


def bottleneck_forward(x_nchw, weight, bias, *, stride, padding,
                       compute_dtype=None, batch_blocks=1):
    """x_nchw: (N, Cin, H, W); weight: (Cout, Cin, KH, KW); bias: (Cout,)."""
    n, c_in, h, w = x_nchw.shape
    c_out, c_in_w, kh, kw = weight.shape
    assert c_in_w == c_in
    assert n % batch_blocks == 0

    h_out = (h + 2 * padding - kh) // stride + 1
    w_out = (w + 2 * padding - kw) // stride + 1
    hp, wp = h + 2 * padding, w + 2 * padding
    k_dim = kh * kw * c_in
    # Flattened output columns with row pitch Wp (valid cols: wo < Wout).
    n_cols = (h_out - 1) * wp + w_out
    nb = n // batch_blocks

    if compute_dtype is None:
        compute_dtype = x_nchw.dtype      # bf16 input -> bf16 MXU path

    # Wrapper-side prep: spatial zero-pad + free contiguous flatten.
    # (No NCHW<->NHWC transpose on either side any more.)
    x_pad = jnp.pad(x_nchw, ((0, 0), (0, 0),
                             (padding, padding), (padding, padding)))
    x_flat = x_pad.reshape(n, c_in, hp * wp)

    # OIHW -> (Cout, KH, KW, Cin) -> (Cout, K); K ordered (kh, kw, c) to match
    # the kernel's im2col row order.
    w2d = jnp.transpose(weight, (0, 2, 3, 1)).reshape(c_out, k_dim)
    w2d = w2d.astype(compute_dtype)
    b2d = bias.reshape(c_out, 1).astype(jnp.float32)

    kernel = functools.partial(
        _bottleneck_kernel, n_batch=nb, c_in=c_in, kh_size=kh, kw_size=kw,
        stride=stride, w_padded=wp, n_cols=n_cols)

    in_bytes = jnp.dtype(x_nchw.dtype).itemsize
    cd_bytes = jnp.dtype(compute_dtype).itemsize
    cost = pl.CostEstimate(
        flops=2 * n * c_out * k_dim * n_cols + 2 * n * c_out * n_cols,
        transcendentals=0,
        bytes_accessed=(n * c_in * hp * wp * in_bytes
                        + c_out * k_dim * cd_bytes
                        + c_out * 4
                        + n * c_out * n_cols * in_bytes))

    out_flat = pl.pallas_call(
        kernel,
        out_shape=jax.ShapeDtypeStruct((n, c_out, n_cols), x_nchw.dtype),
        grid_spec=pltpu.PrefetchScalarGridSpec(
            num_scalar_prefetch=0,
            grid=(batch_blocks,),          # 1 by default; 2 for v7x megacore
            in_specs=[
                pl.BlockSpec((nb, c_in, hp * wp), lambda i: (i, 0, 0)),
                pl.BlockSpec((c_out, k_dim), lambda i: (0, 0)),
                pl.BlockSpec((c_out, 1), lambda i: (0, 0)),
            ],
            out_specs=pl.BlockSpec((nb, c_out, n_cols), lambda i: (i, 0, 0)),
            scratch_shapes=[pltpu.VMEM((k_dim, n_cols), compute_dtype)],
        ),
        compiler_params=pltpu.CompilerParams(
            dimension_semantics=("parallel",),
            vmem_limit_bytes=32 * 1024 * 1024),
        cost_estimate=cost,
    )(x_flat, w2d, b2d)

    # Crop the junk (Wp - Wout) columns per output row: cheap pad + reshape +
    # slice; the result is already NCHW-ordered (no transpose pass).
    out_rows = jnp.pad(out_flat, ((0, 0), (0, 0), (0, h_out * wp - n_cols)))
    out_rows = out_rows.reshape(n, c_out, h_out, wp)
    return out_rows[:, :, :, :w_out]


def reference_forward(x_nchw, weight, bias, *, stride, padding):
    y = jax.lax.conv_general_dilated(
        x_nchw, weight,
        window_strides=(stride, stride),
        padding=[(padding, padding), (padding, padding)],
        dimension_numbers=("NCHW", "OIHW", "NCHW"))
    y = y + bias.reshape(1, -1, 1, 1)
    return jnp.maximum(y, 0.0)


if __name__ == "__main__":
    # config = {'channels': 4, 'kernel_size': 3, 'stride': 1, 'padding': 1}
    channels, kernel_size, stride, padding = 4, 3, 1, 1
    batch, height, width = 2, 16, 16

    key = jax.random.PRNGKey(0)
    kx, kw_key, kb_key = jax.random.split(key, 3)

    x = jax.random.normal(kx, (batch, channels, height, width), jnp.float32)
    fan_in = channels * kernel_size * kernel_size
    bound = 1.0 / (fan_in ** 0.5)
    weight = jax.random.uniform(
        kw_key, (channels, channels, kernel_size, kernel_size),
        jnp.float32, -bound, bound)
    bias = jax.random.uniform(kb_key, (channels,), jnp.float32, -bound, bound)

    ref = reference_forward(x, weight, bias, stride=stride, padding=padding)

    # Default path: compute dtype follows the input (f32 here -> exact).
    out = bottleneck_forward(x, weight, bias, stride=stride, padding=padding)
    out = jax.block_until_ready(out)
    assert out.shape == ref.shape == (batch, channels, height, width)
    assert jnp.allclose(out, ref, atol=1e-5, rtol=1e-5), "f32 mismatch vs reference"

    # bf16-MXU operand path (f32 accumulation), per perf review; looser tol.
    out_bf16 = bottleneck_forward(x, weight, bias, stride=stride,
                                  padding=padding, compute_dtype=jnp.bfloat16)
    out_bf16 = jax.block_until_ready(out_bf16)
    assert jnp.allclose(out_bf16, ref, atol=2e-2, rtol=2e-2), "bf16 mismatch vs reference"

    print("KERNEL_OK")
</pallas_src>

<mosaic_0001>
module attributes {stable_mosaic.version = 11 : i64} {
  func.func @_bottleneck_kernel(%arg0: i32, %arg1: memref<2x4x324xf32, #tpu.memory_space<vmem>>, %arg2: memref<4x36xf32, #tpu.memory_space<vmem>>, %arg3: memref<4x1xf32, #tpu.memory_space<vmem>>, %arg4: memref<2x4x286xf32, #tpu.memory_space<vmem>>, %arg5: memref<36x286xf32, #tpu.memory_space<vmem>>) attributes {dimension_semantics = [#tpu.dimension_semantics<parallel>], iteration_bounds = array<i64: 1>, scalar_prefetch = 0 : i64, scratch_operands = 1 : i64, tpu.core_type = #tpu.core_type<tc>, window_params = [{transform_indices = @transform_0, window_bounds = array<i64: 2, 4, 324>}, {pipeline_mode = #tpu.pipeline_mode<synchronous>, transform_indices = @transform_1, window_bounds = array<i64: 4, 36>}, {pipeline_mode = #tpu.pipeline_mode<synchronous>, transform_indices = @transform_2, window_bounds = array<i64: 4, 1>}, {transform_indices = @transform_3, window_bounds = array<i64: 2, 4, 286>}]} {
    %c0 = arith.constant 0 : index
    %c0_0 = arith.constant 0 : index
    %c0_1 = arith.constant 0 : index
    %0 = vector.load %arg1[%c0, %c0_0, %c0_1] : memref<2x4x324xf32, #tpu.memory_space<vmem>>, vector<1x4x324xf32>
    %1 = vector.shape_cast %0 : vector<1x4x324xf32> to vector<4x324xf32>
    %2 = vector.extract_strided_slice %1 {offsets = [0, 0], sizes = [4, 286], strides = [1, 1]} : vector<4x324xf32> to vector<4x286xf32>
    %c0_2 = arith.constant 0 : index
    %c0_3 = arith.constant 0 : index
    %3 = vector.load %arg5[%c0_2, %c0_3] : memref<36x286xf32, #tpu.memory_space<vmem>>, vector<4x286xf32>
    tpu.vector_store %arg5[%c0_2, %c0_3], %2 {strides = array<i32>} : memref<36x286xf32, #tpu.memory_space<vmem>>, vector<4x286xf32>,
    %4 = vector.extract_strided_slice %1 {offsets = [0, 1], sizes = [4, 286], strides = [1, 1]} : vector<4x324xf32> to vector<4x286xf32>
    %c4 = arith.constant 4 : index
    %c0_4 = arith.constant 0 : index
    %5 = vector.load %arg5[%c4, %c0_4] : memref<36x286xf32, #tpu.memory_space<vmem>>, vector<4x286xf32>
    tpu.vector_store %arg5[%c4, %c0_4], %4 {strides = array<i32>} : memref<36x286xf32, #tpu.memory_space<vmem>>, vector<4x286xf32>,
    %6 = vector.extract_strided_slice %1 {offsets = [0, 2], sizes = [4, 286], strides = [1, 1]} : vector<4x324xf32> to vector<4x286xf32>
    %c8 = arith.constant 8 : index
    %c0_5 = arith.constant 0 : index
    %7 = vector.load %arg5[%c8, %c0_5] : memref<36x286xf32, #tpu.memory_space<vmem>>, vector<4x286xf32>
    tpu.vector_store %arg5[%c8, %c0_5], %6 {strides = array<i32>} : memref<36x286xf32, #tpu.memory_space<vmem>>, vector<4x286xf32>,
    %8 = vector.extract_strided_slice %1 {offsets = [0, 18], sizes = [4, 286], strides = [1, 1]} : vector<4x324xf32> to vector<4x286xf32>
    %c12 = arith.constant 12 : index
    %c0_6 = arith.constant 0 : index
    %9 = vector.load %arg5[%c12, %c0_6] : memref<36x286xf32, #tpu.memory_space<vmem>>, vector<4x286xf32>
    tpu.vector_store %arg5[%c12, %c0_6], %8 {strides = array<i32>} : memref<36x286xf32, #tpu.memory_space<vmem>>, vector<4x286xf32>,
    %10 = vector.extract_strided_slice %1 {offsets = [0, 19], sizes = [4, 286], strides = [1, 1]} : vector<4x324xf32> to vector<4x286xf32>
    %c16 = arith.constant 16 : index
    %c0_7 = arith.constant 0 : index
    %11 = vector.load %arg5[%c16, %c0_7] : memref<36x286xf32, #tpu.memory_space<vmem>>, vector<4x286xf32>
    tpu.vector_store %arg5[%c16, %c0_7], %10 {strides = array<i32>} : memref<36x286xf32, #tpu.memory_space<vmem>>, vector<4x286xf32>,
    %12 = vector.extract_strided_slice %1 {offsets = [0, 20], sizes = [4, 286], strides = [1, 1]} : vector<4x324xf32> to vector<4x286xf32>
    %c20 = arith.constant 20 : index
    %c0_8 = arith.constant 0 : index
    %13 = vector.load %arg5[%c20, %c0_8] : memref<36x286xf32, #tpu.memory_space<vmem>>, vector<4x286xf32>
    tpu.vector_store %arg5[%c20, %c0_8], %12 {strides = array<i32>} : memref<36x286xf32, #tpu.memory_space<vmem>>, vector<4x286xf32>,
    %14 = vector.extract_strided_slice %1 {offsets = [0, 36], sizes = [4, 286], strides = [1, 1]} : vector<4x324xf32> to vector<4x286xf32>
    %c24 = arith.constant 24 : index
    %c0_9 = arith.constant 0 : index
    %15 = vector.load %arg5[%c24, %c0_9] : memref<36x286xf32, #tpu.memory_space<vmem>>, vector<4x286xf32>
    tpu.vector_store %arg5[%c24, %c0_9], %14 {strides = array<i32>} : memref<36x286xf32, #tpu.memory_space<vmem>>, vector<4x286xf32>,
    %16 = vector.extract_strided_slice %1 {offsets = [0, 37], sizes = [4, 286], strides = [1, 1]} : vector<4x324xf32> to vector<4x286xf32>
    %c28 = arith.constant 28 : index
    %c0_10 = arith.constant 0 : index
    %17 = vector.load %arg5[%c28, %c0_10] : memref<36x286xf32, #tpu.memory_space<vmem>>, vector<4x286xf32>
    tpu.vector_store %arg5[%c28, %c0_10], %16 {strides = array<i32>} : memref<36x286xf32, #tpu.memory_space<vmem>>, vector<4x286xf32>,
    %18 = vector.extract_strided_slice %1 {offsets = [0, 38], sizes = [4, 286], strides = [1, 1]} : vector<4x324xf32> to vector<4x286xf32>
    %c32 = arith.constant 32 : index
    %c0_11 = arith.constant 0 : index
    %19 = vector.load %arg5[%c32, %c0_11] : memref<36x286xf32, #tpu.memory_space<vmem>>, vector<4x286xf32>
    tpu.vector_store %arg5[%c32, %c0_11], %18 {strides = array<i32>} : memref<36x286xf32, #tpu.memory_space<vmem>>, vector<4x286xf32>,
    %c0_12 = arith.constant 0 : index
    %c0_13 = arith.constant 0 : index
    %20 = vector.load %arg2[%c0_12, %c0_13] : memref<4x36xf32, #tpu.memory_space<vmem>>, vector<4x36xf32>
    %c0_14 = arith.constant 0 : index
    %c0_15 = arith.constant 0 : index
    %21 = vector.load %arg5[%c0_14, %c0_15] : memref<36x286xf32, #tpu.memory_space<vmem>>, vector<36x286xf32>
    %cst = arith.constant dense<0.000000e+00> : vector<4x286xf32>
    %22 = tpu.matmul %20, %21, %cst {dimension_numbers = #tpu.dot_dimension_numbers<[1], [0], [0], [1], [0, 0, 1, 1], [], []>} : vector<4x36xf32>, vector<36x286xf32>, vector<4x286xf32> -> vector<4x286xf32>
    %c0_16 = arith.constant 0 : index
    %c0_17 = arith.constant 0 : index
    %23 = vector.load %arg3[%c0_16, %c0_17] : memref<4x1xf32, #tpu.memory_space<vmem>>, vector<4x1xf32>
    %24 = vector.broadcast %23 : vector<4x1xf32> to vector<4x286xf32>
    %25 = arith.addf %22, %24 : vector<4x286xf32>
    %cst_18 = arith.constant 0.000000e+00 : f32
    %26 = vector.broadcast %cst_18 : f32 to vector<4x286xf32>
    %27 = arith.maximumf %25, %26 : vector<4x286xf32>
    %c0_19 = arith.constant 0 : index
    %c0_20 = arith.constant 0 : index
    %c0_21 = arith.constant 0 : index
    %28 = vector.load %arg4[%c0_19, %c0_20, %c0_21] : memref<2x4x286xf32, #tpu.memory_space<vmem>>, vector<1x4x286xf32>
    %29 = vector.shape_cast %28 : vector<1x4x286xf32> to vector<4x286xf32>
    %30 = vector.shape_cast %27 : vector<4x286xf32> to vector<1x4x286xf32>
    tpu.vector_store %arg4[%c0_19, %c0_20, %c0_21], %30 {strides = array<i32>} : memref<2x4x286xf32, #tpu.memory_space<vmem>>, vector<1x4x286xf32>,
    %c1 = arith.constant 1 : index
    %c0_22 = arith.constant 0 : index
    %c0_23 = arith.constant 0 : index
    %31 = vector.load %arg1[%c1, %c0_22, %c0_23] : memref<2x4x324xf32, #tpu.memory_space<vmem>>, vector<1x4x324xf32>
    %32 = vector.shape_cast %31 : vector<1x4x324xf32> to vector<4x324xf32>
    %33 = vector.extract_strided_slice %32 {offsets = [0, 0], sizes = [4, 286], strides = [1, 1]} : vector<4x324xf32> to vector<4x286xf32>
    %c0_24 = arith.constant 0 : index
    %c0_25 = arith.constant 0 : index
    %34 = vector.load %arg5[%c0_24, %c0_25] : memref<36x286xf32, #tpu.memory_space<vmem>>, vector<4x286xf32>
    tpu.vector_store %arg5[%c0_24, %c0_25], %33 {strides = array<i32>} : memref<36x286xf32, #tpu.memory_space<vmem>>, vector<4x286xf32>,
    %35 = vector.extract_strided_slice %32 {offsets = [0, 1], sizes = [4, 286], strides = [1, 1]} : vector<4x324xf32> to vector<4x286xf32>
    %c4_26 = arith.constant 4 : index
    %c0_27 = arith.constant 0 : index
    %36 = vector.load %arg5[%c4_26, %c0_27] : memref<36x286xf32, #tpu.memory_space<vmem>>, vector<4x286xf32>
    tpu.vector_store %arg5[%c4_26, %c0_27], %35 {strides = array<i32>} : memref<36x286xf32, #tpu.memory_space<vmem>>, vector<4x286xf32>,
    %37 = vector.extract_strided_slice %32 {offsets = [0, 2], sizes = [4, 286], strides = [1, 1]} : vector<4x324xf32> to vector<4x286xf32>
    %c8_28 = arith.constant 8 : index
    %c0_29 = arith.constant 0 : index
    %38 = vector.load %arg5[%c8_28, %c0_29] : memref<36x286xf32, #tpu.memory_space<vmem>>, vector<4x286xf32>
    tpu.vector_store %arg5[%c8_28, %c0_29], %37 {strides = array<i32>} : memref<36x286xf32, #tpu.memory_space<vmem>>, vector<4x286xf32>,
    %39 = vector.extract_strided_slice %32 {offsets = [0, 18], sizes = [4, 286], strides = [1, 1]} : vector<4x324xf32> to vector<4x286xf32>
    %c12_30 = arith.constant 12 : index
    %c0_31 = arith.constant 0 : index
    %40 = vector.load %arg5[%c12_30, %c0_31] : memref<36x286xf32, #tpu.memory_space<vmem>>, vector<4x286xf32>
    tpu.vector_store %arg5[%c12_30, %c0_31], %39 {strides = array<i32>} : memref<36x286xf32, #tpu.memory_space<vmem>>, vector<4x286xf32>,
    %41 = vector.extract_strided_slice %32 {offsets = [0, 19], sizes = [4, 286], strides = [1, 1]} : vector<4x324xf32> to vector<4x286xf32>
    %c16_32 = arith.constant 16 : index
    %c0_33 = arith.constant 0 : index
    %42 = vector.load %arg5[%c16_32, %c0_33] : memref<36x286xf32, #tpu.memory_space<vmem>>, vector<4x286xf32>
    tpu.vector_store %arg5[%c16_32, %c0_33], %41 {strides = array<i32>} : memref<36x286xf32, #tpu.memory_space<vmem>>, vector<4x286xf32>,
    %43 = vector.extract_strided_slice %32 {offsets = [0, 20], sizes = [4, 286], strides = [1, 1]} : vector<4x324xf32> to vector<4x286xf32>
    %c20_34 = arith.constant 20 : index
    %c0_35 = arith.constant 0 : index
    %44 = vector.load %arg5[%c20_34, %c0_35] : memref<36x286xf32, #tpu.memory_space<vmem>>, vector<4x286xf32>
    tpu.vector_store %arg5[%c20_34, %c0_35], %43 {strides = array<i32>} : memref<36x286xf32, #tpu.memory_space<vmem>>, vector<4x286xf32>,
    %45 = vector.extract_strided_slice %32 {offsets = [0, 36], sizes = [4, 286], strides = [1, 1]} : vector<4x324xf32> to vector<4x286xf32>
    %c24_36 = arith.constant 24 : index
    %c0_37 = arith.constant 0 : index
    %46 = vector.load %arg5[%c24_36, %c0_37] : memref<36x286xf32, #tpu.memory_space<vmem>>, vector<4x286xf32>
    tpu.vector_store %arg5[%c24_36, %c0_37], %45 {strides = array<i32>} : memref<36x286xf32, #tpu.memory_space<vmem>>, vector<4x286xf32>,
    %47 = vector.extract_strided_slice %32 {offsets = [0, 37], sizes = [4, 286], strides = [1, 1]} : vector<4x324xf32> to vector<4x286xf32>
    %c28_38 = arith.constant 28 : index
    %c0_39 = arith.constant 0 : index
    %48 = vector.load %arg5[%c28_38, %c0_39] : memref<36x286xf32, #tpu.memory_space<vmem>>, vector<4x286xf32>
    tpu.vector_store %arg5[%c28_38, %c0_39], %47 {strides = array<i32>} : memref<36x286xf32, #tpu.memory_space<vmem>>, vector<4x286xf32>,
    %49 = vector.extract_strided_slice %32 {offsets = [0, 38], sizes = [4, 286], strides = [1, 1]} : vector<4x324xf32> to vector<4x286xf32>
    %c32_40 = arith.constant 32 : index
    %c0_41 = arith.constant 0 : index
    %50 = vector.load %arg5[%c32_40, %c0_41] : memref<36x286xf32, #tpu.memory_space<vmem>>, vector<4x286xf32>
    tpu.vector_store %arg5[%c32_40, %c0_41], %49 {strides = array<i32>} : memref<36x286xf32, #tpu.memory_space<vmem>>, vector<4x286xf32>,
    %c0_42 = arith.constant 0 : index
    %c0_43 = arith.constant 0 : index
    %51 = vector.load %arg2[%c0_42, %c0_43] : memref<4x36xf32, #tpu.memory_space<vmem>>, vector<4x36xf32>
    %c0_44 = arith.constant 0 : index
    %c0_45 = arith.constant 0 : index
    %52 = vector.load %arg5[%c0_44, %c0_45] : memref<36x286xf32, #tpu.memory_space<vmem>>, vector<36x286xf32>
    %cst_46 = arith.constant dense<0.000000e+00> : vector<4x286xf32>
    %53 = tpu.matmul %51, %52, %cst_46 {dimension_numbers = #tpu.dot_dimension_numbers<[1], [0], [0], [1], [0, 0, 1, 1], [], []>} : vector<4x36xf32>, vector<36x286xf32>, vector<4x286xf32> -> vector<4x286xf32>
    %c0_47 = arith.constant 0 : index
    %c0_48 = arith.constant 0 : index
    %54 = vector.load %arg3[%c0_47, %c0_48] : memref<4x1xf32, #tpu.memory_space<vmem>>, vector<4x1xf32>
    %55 = vector.broadcast %54 : vector<4x1xf32> to vector<4x286xf32>
    %56 = arith.addf %53, %55 : vector<4x286xf32>
    %cst_49 = arith.constant 0.000000e+00 : f32
    %57 = vector.broadcast %cst_49 : f32 to vector<4x286xf32>
    %58 = arith.maximumf %56, %57 : vector<4x286xf32>
    %c1_50 = arith.constant 1 : index
    %c0_51 = arith.constant 0 : index
    %c0_52 = arith.constant 0 : index
    %59 = vector.load %arg4[%c1_50, %c0_51, %c0_52] : memref<2x4x286xf32, #tpu.memory_space<vmem>>, vector<1x4x286xf32>
    %60 = vector.shape_cast %59 : vector<1x4x286xf32> to vector<4x286xf32>
    %61 = vector.shape_cast %58 : vector<4x286xf32> to vector<1x4x286xf32>
    tpu.vector_store %arg4[%c1_50, %c0_51, %c0_52], %61 {strides = array<i32>} : memref<2x4x286xf32, #tpu.memory_space<vmem>>, vector<1x4x286xf32>,
    return
  }
  func.func @transform_0(%arg0: i32) -> (i32, i32, i32) {
    %c0_i32 = arith.constant 0 : i32
    %c0_i32_0 = arith.constant 0 : i32
    %c0_i32_1 = arith.constant 0 : i32
    return %arg0, %c0_i32, %c0_i32_0 : i32, i32, i32
  }
  func.func @transform_1(%arg0: i32) -> (i32, i32) {
    %c0_i32 = arith.constant 0 : i32
    %c0_i32_0 = arith.constant 0 : i32
    %c0_i32_1 = arith.constant 0 : i32
    return %c0_i32, %c0_i32_0 : i32, i32
  }
  func.func @transform_2(%arg0: i32) -> (i32, i32) {
    %c0_i32 = arith.constant 0 : i32
    %c0_i32_0 = arith.constant 0 : i32
    %c0_i32_1 = arith.constant 0 : i32
    return %c0_i32, %c0_i32_0 : i32, i32
  }
  func.func @transform_3(%arg0: i32) -> (i32, i32, i32) {
    %c0_i32 = arith.constant 0 : i32
    %c0_i32_0 = arith.constant 0 : i32
    %c0_i32_1 = arith.constant 0 : i32
    return %arg0, %c0_i32, %c0_i32_0 : i32, i32, i32
  }
}

</mosaic_0001>

<llo_original>
// kernel: tpu_custom_call.1
$region0: #{tpu_custom_call.1}
  #allocation0 [shape = 'u32[]', space=smem, size = 0x4, offset = 0x4, fixed_abs, tag = 'smem constant byte address 0x4 - core index']
  #allocation1 [shape = 'u32[144,128]{1,0:T(1,128)}', space=vmem, size = 0x12000, scoped, tag = 'internal scratch']
  #allocation2 [shape = 'f32[36,286]{1,0:T(8,128)}', space=vmem, size = 0xf000, scoped, tag = 'scratch operand']
  %s0 = inlined_call_operand.hbm [shape: f32[2,4,324], index: 0, kind: input, shape index: {}]
  %s1 = inlined_call_operand.vmem [shape: f32[4,36], index: 1, kind: input, shape index: {}]
  %s2 = inlined_call_operand.vmem [shape: f32[4,1], index: 2, kind: input, shape index: {}]
  %s3 = inlined_call_operand.hbm [shape: f32[2,4,286], index: 3, kind: output, shape index: {}]
  %s4 = sld [smem:[#allocation0]]
  $region26: #{tpu_custom_call.1} parent=0
    _
  %s6 = ssub.s32 1, %s4
  %s7 = scalar_select 0, %s6, %s4
  $region1: #{tpu_custom_call.1} parent=0
    #allocation3 [shape = 'u8[12288]{0}', space=vmem, size = 0x3000, scoped, tag = 'input window, operand 0, single buffered']
    #allocation4 [shape = 's32[1]{0}', space=sflag, size = 0x4, scoped, tag = 'scoped memory for tpu_custom_call.1']
    #allocation5 [shape = 's32[1]{0}', space=sflag, size = 0x4, scoped, tag = 'scoped memory for tpu_custom_call.1']
    #allocation6 [shape = 'u8[12288]{0}', space=vmem, size = 0x3000, scoped, tag = 'output window, operand 0, single buffered']
    %8 = vsyncpa [#allocation4], 0
    %9 = vsyncpa [#allocation5], 0
    // Predicated region
    $region2: #{tpu_custom_call.1} parent=1 // pred_check
      _
    $region3: #{tpu_custom_call.1} parent=1 // pred_check_branch
      %11 = sbr.rel (0) target = $region5
    $region4: #{tpu_custom_call.1} parent=1 // pred_region
      %s13 = ssub.s32 384, 384
      %14 = vsyncadd [#allocation4], %s13
      %s15 = sshll.u32 [#allocation3], 4
      %s16 = int_to_ptr.vmem [resolvable:$true] %s15
      %21 = dma.hbm_to_vmem [thread:$0]  %s0, 384, %s16, [#allocation4], 192, 192, 12
    $region5: #{tpu_custom_call.1} parent=1 // pred_fallthru
      _
    // Predicated region
    $region6: #{tpu_custom_call.1} parent=1 // pred_check
      _
    $region7: #{tpu_custom_call.1} parent=1 // pred_check_branch
      %23 = sbr.rel (0) target = $region9
    $region8: #{tpu_custom_call.1} parent=1 // pred_region
      _
    $region9: #{tpu_custom_call.1} parent=1 // pred_fallthru
      _
    // Predicated region
    $region10: #{tpu_custom_call.1} parent=1 // pred_check
      _
    $region11: #{tpu_custom_call.1} parent=1 // pred_check_branch
      %25 = sbr.rel (0) target = $region13
    $region12: #{tpu_custom_call.1} parent=1 // pred_region
      _
    $region13: #{tpu_custom_call.1} parent=1 // pred_fallthru
      _
    // Predicated region
    $region14: #{tpu_custom_call.1} parent=1 // pred_check
      _
    $region15: #{tpu_custom_call.1} parent=1 // pred_check_branch
      %27 = sbr.rel (0) target = $region17
    $region16: #{tpu_custom_call.1} parent=1 // pred_region
      %28 = dma.done [#allocation4], 384
    $region17: #{tpu_custom_call.1} parent=1 // pred_fallthru
      _
    %v29 = vld [vmem:[#allocation3] sm:$0xff]
    %v30 = vld [vmem:[#allocation3 + $0x8] sm:$0xf]
    %v33 = vcombine.high %v29, %v29
    %35 = vst [vmem:[#allocation2] sm:$0xf] %v29
    %36 = vst [vmem:[#allocation2 + $0x8] sm:$0xf] %v33
    %vm37 = vcmask 240640
    %38 = vst.msk [vmem:[#allocation2 + $0x10] sm:$0xf] %vm37, %v30
    %v39 = vcombine.low %v29, %v29
    %v40 = vcombine.low %v30, %v30
    %41 = vrot.lane.b32.xlu0 %v39, 127
    %v42 = vpop.permute.xlu0 %41
    %43 = vrot.lane.b32.xlu0 %v29, 127
    %v44 = vpop.permute.xlu0 %43
    %45 = vrot.lane.b32.xlu0 %v40, 127
    %v46 = vpop.permute.xlu0 %45
    %vm47 = vcmask 1039360
    %v48 = vsel %vm47, %v42, %v44
    %v49 = vsel %vm47, %v44, %v46
    %53 = vst [vmem:[#allocation2] sm:$0xf0] %v48
    %54 = vst [vmem:[#allocation2 + $0x8] sm:$0xf0] %v49
    %vm55 = vcmask 244740
    %56 = vst.msk [vmem:[#allocation2 + $0x10] sm:$0xf0] %vm55, %v46
    %57 = vrot.lane.b32.xlu0 %v29, 126
    %v58 = vpop.permute.xlu0 %57
    %59 = vrot.lane.b32.xlu0 %v33, 126
    %v60 = vpop.permute.xlu0 %59
    %61 = vrot.lane.b32.xlu0 %v30, 126
    %v62 = vpop.permute.xlu0 %61
    %vm63 = vcmask 1031168
    %v64 = vsel %vm63, %v58, %v60
    %v65 = vsel %vm63, %v60, %v62
    %69 = vst [vmem:[#allocation2 + $0x18] sm:$0xf] %v64
    %70 = vst [vmem:[#allocation2 + $0x20] sm:$0xf] %v65
    %71 = vst.msk [vmem:[#allocation2 + $0x28] sm:$0xf] %vm37, %v62
    %72 = vrot.lane.b32.xlu0 %v39, 110
    %v73 = vpop.permute.xlu0 %72
    %74 = vrot.lane.b32.xlu0 %v29, 110
    %v75 = vpop.permute.xlu0 %74
    %76 = vrot.lane.b32.xlu0 %v40, 110
    %v77 = vpop.permute.xlu0 %76
    %vm78 = vcmask 900096
    %v79 = vsel %vm78, %v73, %v75
    %v80 = vsel %vm78, %v75, %v77
    %84 = vst [vmem:[#allocation2 + $0x18] sm:$0xf0] %v79
    %85 = vst [vmem:[#allocation2 + $0x20] sm:$0xf0] %v80
    %86 = vst.msk [vmem:[#allocation2 + $0x28] sm:$0xf0] %vm55, %v77
    %87 = vrot.lane.b32.xlu0 %v29, 109
    %v88 = vpop.permute.xlu0 %87
    %89 = vrot.lane.b32.xlu0 %v33, 109
    %v90 = vpop.permute.xlu0 %89
    %91 = vrot.lane.b32.xlu0 %v30, 109
    %v92 = vpop.permute.xlu0 %91
    %vm93 = vcmask 891904
    %v94 = vsel %vm93, %v88, %v90
    %v95 = vsel %vm93, %v90, %v92
    %99 = vst [vmem:[#allocation2 + $0x30] sm:$0xf] %v94
    %100 = vst [vmem:[#allocation2 + $0x38] sm:$0xf] %v95
    %101 = vst.msk [vmem:[#allocation2 + $0x40] sm:$0xf] %vm37, %v92
    %102 = vrot.lane.b32.xlu0 %v39, 108
    %v103 = vpop.permute.xlu0 %102
    %104 = vrot.lane.b32.xlu0 %v29, 108
    %v105 = vpop.permute.xlu0 %104
    %106 = vrot.lane.b32.xlu0 %v40, 108
    %v107 = vpop.permute.xlu0 %106
    %vm108 = vcmask 883712
    %v109 = vsel %vm108, %v103, %v105
    %v110 = vsel %vm108, %v105, %v107
    %114 = vst [vmem:[#allocation2 + $0x30] sm:$0xf0] %v109
    %115 = vst [vmem:[#allocation2 + $0x38] sm:$0xf0] %v110
    %116 = vst.msk [vmem:[#allocation2 + $0x40] sm:$0xf0] %vm55, %v107
    %117 = vrot.lane.b32.xlu0 %v29, 92
    %v118 = vpop.permute.xlu0 %117
    %119 = vrot.lane.b32.xlu0 %v33, 92
    %v120 = vpop.permute.xlu0 %119
    %121 = vrot.lane.b32.xlu0 %v30, 92
    %v122 = vpop.permute.xlu0 %121
    %vm123 = vcmask 752640
    %v124 = vsel %vm123, %v118, %v120
    %v125 = vsel %vm123, %v120, %v122
    %129 = vst [vmem:[#allocation2 + $0x48] sm:$0xf] %v124
    %130 = vst [vmem:[#allocation2 + $0x50] sm:$0xf] %v125
    %131 = vst.msk [vmem:[#allocation2 + $0x58] sm:$0xf] %vm37, %v122
    %132 = vrot.lane.b32.xlu0 %v39, 91
    %v133 = vpop.permute.xlu0 %132
    %134 = vrot.lane.b32.xlu0 %v29, 91
    %v135 = vpop.permute.xlu0 %134
    %136 = vrot.lane.b32.xlu0 %v40, 91
    %v137 = vpop.permute.xlu0 %136
    %vm138 = vcmask 744448
    %v139 = vsel %vm138, %v133, %v135
    %v140 = vsel %vm138, %v135, %v137
    %144 = vst [vmem:[#allocation2 + $0x48] sm:$0xf0] %v139
    %145 = vst [vmem:[#allocation2 + $0x50] sm:$0xf0] %v140
    %146 = vst.msk [vmem:[#allocation2 + $0x58] sm:$0xf0] %vm55, %v137
    %147 = vrot.lane.b32.xlu0 %v29, 90
    %v148 = vpop.permute.xlu0 %147
    %149 = vrot.lane.b32.xlu0 %v33, 90
    %v150 = vpop.permute.xlu0 %149
    %151 = vrot.lane.b32.xlu0 %v30, 90
    %v152 = vpop.permute.xlu0 %151
    %vm153 = vcmask 736256
    %v154 = vsel %vm153, %v148, %v150
    %v155 = vsel %vm153, %v150, %v152
    %159 = vst [vmem:[#allocation2 + $0x60] sm:$0xf] %v154
    %160 = vst [vmem:[#allocation2 + $0x68] sm:$0xf] %v155
    %161 = vst.msk [vmem:[#allocation2 + $0x70] sm:$0xf] %vm37, %v152
    %v162 = vld [vmem:[%s1] sm:$0xf]
    %v163 = vld [vmem:[#allocation2] sm:$0xff]
    %v164 = vld [vmem:[#allocation2 + $0x8] sm:$0xff]
    %v165 = vld [vmem:[#allocation2 + $0x10] sm:$0xff]
    %v166 = vld [vmem:[#allocation2 + $0x18] sm:$0xff]
    %v167 = vld [vmem:[#allocation2 + $0x20] sm:$0xff]
    %v168 = vld [vmem:[#allocation2 + $0x28] sm:$0xff]
    %v169 = vld [vmem:[#allocation2 + $0x30] sm:$0xff]
    %v170 = vld [vmem:[#allocation2 + $0x38] sm:$0xff]
    %v171 = vld [vmem:[#allocation2 + $0x40] sm:$0xff]
    %v172 = vld [vmem:[#allocation2 + $0x48] sm:$0xff]
    %v173 = vld [vmem:[#allocation2 + $0x50] sm:$0xff]
    %v174 = vld [vmem:[#allocation2 + $0x58] sm:$0xff]
    %v175 = vld [vmem:[#allocation2 + $0x60] sm:$0xf]
    %v176 = vld [vmem:[#allocation2 + $0x68] sm:$0xf]
    %v177 = vld [vmem:[#allocation2 + $0x70] sm:$0xf]
    %v178 = vld [vmem:[%s2] sm:$0xf]
    %180 = vset.pattern.permute.xlu0 0
    %181 = vperm.xlu0 %180, %v178
    %v182 = vpop.permute.xlu0 %181
    %vm184 = vcmask 293888
    %v186 = vsel %vm184, %v162, 0
    %vm188 = vcmask 1043456
    %v190 = vsel %vm188, %v175, 0
    %v193 = vsel %vm188, %v176, 0
    %v196 = vsel %vm188, %v177, 0
    %198 = vmatprep.subr.mxu0 %v164
    %199 = vmatpush1.msra.mxu0 %v163
    %200 = vmatprep.subr.mxu0 %v167
    %201 = vmatpush1.msra.mxu0 %v166
    %202 = vmatprep.subr.mxu0 %v170
    %203 = vmatpush1.msra.mxu0 %v169
    %204 = vmatprep.subr.mxu0 %v173
    %205 = vmatpush1.msra.mxu0 %v172
    %206 = vmatprep.subr.mxu0 %v193
    %207 = vmatpush1.msra.mxu0 %v190
    %208 = vmatprep.subr.mxu0 0.0
    %209 = vmatpush1.msra.mxu0 0.0
    %210 = vmatprep.subr.mxu0 0.0
    %211 = vmatpush1.msra.mxu0 0.0
    %212 = vmatprep.subr.mxu0 0.0
    %213 = vmatpush1.msra.mxu0 0.0
    %214 = vmatprep.subr.mxu0 0.0
    %215 = vmatpush1.msra.mxu0 0.0
    %216 = vmatprep.subr.mxu0 0.0
    %217 = vmatpush1.msra.mxu0 0.0
    %218 = vmatprep.subr.mxu0 0.0
    %219 = vmatpush1.msra.mxu0 0.0
    %220 = vmatprep.subr.mxu0 0.0
    %221 = vmatpush1.msra.mxu0 0.0
    %222 = vmatprep.subr.mxu0 0.0
    %223 = vmatpush1.msra.mxu0 0.0
    %224 = vmatprep.subr.mxu0 0.0
    %225 = vmatpush1.msra.mxu0 0.0
    %226 = vmatprep.subr.mxu0 0.0
    %227 = vmatpush1.msra.mxu0 0.0
    %228 = vmatprep.subr.mxu0 0.0
    %229 = vmatpush1.msra.mxu0 0.0
    %230 = vmatprep.subr.mxu0 0.0
    %231 = vmatpush1.msra.mxu0 0.0
    %232 = vmatprep.subr.mxu0 0.0
    %233 = vmatpush1.msra.mxu0 0.0
    %234 = vmatprep.subr.mxu0 0.0
    %235 = vmatpush1.msra.mxu0 0.0
    %236 = vmatprep.subr.mxu0 0.0
    %237 = vmatpush1.msra.mxu0 0.0
    %238 = vmatprep.subr.mxu0 0.0
    %239 = vmatpush1.msra.mxu0 0.0
    %240 = vmatprep.subr.mxu0 0.0
    %241 = vmatpush1.msra.mxu0 0.0
    %242 = vmatprep.subr.mxu0 0.0
    %243 = vmatpush1.msra.mxu0 0.0
    %244 = vmatprep.subr.mxu0 0.0
    %245 = vmatpush1.msra.mxu0 0.0
    %246 = vmatprep.subr.mxu0 0.0
    %247 = vmatpush1.msra.mxu0 0.0
    %248 = vmatprep.subr.mxu0 0.0
    %249 = vmatpush1.msra.mxu0 0.0
    %250 = vmatprep.subr.mxu0 0.0
    %251 = vmatpush1.msra.mxu0 0.0
    %252 = vmatprep.subr.mxu0 0.0
    %253 = vmatpush1.msra.mxu0 0.0
    %254 = vmatprep.subr.mxu0 0.0
    %255 = vmatpush1.msra.mxu0 0.0
    %256 = vmatprep.subr.mxu0 0.0
    %257 = vmatpush1.msra.mxu0 0.0
    %258 = vmatprep.subr.mxu0 0.0
    %259 = vmatpush1.msra.mxu0 0.0
    %260 = vmatprep.subr.mxu0 0.0
    %261 = vmatpush1.msra.mxu0 0.0
    %262 = vmatprep.mubr.f32.mxu0 0.0
    %263 = vmatmul.mubr.f32.gmra.mrb[0].mxu0 %v186
    %v264 = vpop.f32.mrb[0].mxu0
    %v265 = vadd.f32 %v182, %v264
    %v266 = vpop.f32.mrb[0].mxu0
    %v267 = vadd.f32 %v182, %v266
    %268 = vdwg.mxu0
    %269 = vmatprep.subr.mxu0 0.0
    %270 = vmatpush1.msra.mxu0 %v165
    %271 = vmatprep.subr.mxu0 0.0
    %272 = vmatpush1.msra.mxu0 %v168
    %273 = vmatprep.subr.mxu0 0.0
    %274 = vmatpush1.msra.mxu0 %v171
    %275 = vmatprep.subr.mxu0 0.0
    %276 = vmatpush1.msra.mxu0 %v174
    %277 = vmatprep.subr.mxu0 0.0
    %278 = vmatpush1.msra.mxu0 %v196
    %279 = vmatprep.subr.mxu0 0.0
    %280 = vmatpush1.msra.mxu0 0.0
    %281 = vmatprep.subr.mxu0 0.0
    %282 = vmatpush1.msra.mxu0 0.0
    %283 = vmatprep.subr.mxu0 0.0
    %284 = vmatpush1.msra.mxu0 0.0
    %285 = vmatprep.subr.mxu0 0.0
    %286 = vmatpush1.msra.mxu0 0.0
    %287 = vmatprep.subr.mxu0 0.0
    %288 = vmatpush1.msra.mxu0 0.0
    %289 = vmatprep.subr.mxu0 0.0
    %290 = vmatpush1.msra.mxu0 0.0
    %291 = vmatprep.subr.mxu0 0.0
    %292 = vmatpush1.msra.mxu0 0.0
    %293 = vmatprep.subr.mxu0 0.0
    %294 = vmatpush1.msra.mxu0 0.0
    %295 = vmatprep.subr.mxu0 0.0
    %296 = vmatpush1.msra.mxu0 0.0
    %297 = vmatprep.subr.mxu0 0.0
    %298 = vmatpush1.msra.mxu0 0.0
    %299 = vmatprep.subr.mxu0 0.0
    %300 = vmatpush1.msra.mxu0 0.0
    %301 = vmatprep.subr.mxu0 0.0
    %302 = vmatpush1.msra.mxu0 0.0
    %303 = vmatprep.subr.mxu0 0.0
    %304 = vmatpush1.msra.mxu0 0.0
    %305 = vmatprep.subr.mxu0 0.0
    %306 = vmatpush1.msra.mxu0 0.0
    %307 = vmatprep.subr.mxu0 0.0
    %308 = vmatpush1.msra.mxu0 0.0
    %309 = vmatprep.subr.mxu0 0.0
    %310 = vmatpush1.msra.mxu0 0.0
    %311 = vmatprep.subr.mxu0 0.0
    %312 = vmatpush1.msra.mxu0 0.0
    %313 = vmatprep.subr.mxu0 0.0
    %314 = vmatpush1.msra.mxu0 0.0
    %315 = vmatprep.subr.mxu0 0.0
    %316 = vmatpush1.msra.mxu0 0.0
    %317 = vmatprep.subr.mxu0 0.0
    %318 = vmatpush1.msra.mxu0 0.0
    %319 = vmatprep.subr.mxu0 0.0
    %320 = vmatpush1.msra.mxu0 0.0
    %321 = vmatprep.subr.mxu0 0.0
    %322 = vmatpush1.msra.mxu0 0.0
    %323 = vmatprep.subr.mxu0 0.0
    %324 = vmatpush1.msra.mxu0 0.0
    %325 = vmatprep.subr.mxu0 0.0
    %326 = vmatpush1.msra.mxu0 0.0
    %327 = vmatprep.subr.mxu0 0.0
    %328 = vmatpush1.msra.mxu0 0.0
    %329 = vmatprep.subr.mxu0 0.0
    %330 = vmatpush1.msra.mxu0 0.0
    %331 = vmatprep.subr.mxu0 0.0
    %332 = vmatpush1.msra.mxu0 0.0
    %333 = vmatprep.mubr.f32.mxu0 0.0
    %334 = vmatmul.mubr.f32.gmra.mrb[0].mxu0 %v186
    %v335 = vpop.f32.mrb[0].mxu0
    %v336 = vadd.f32 %v182, %v335
    %v337 = vpop.f32.mrb[0].mxu0
    %338 = vdwg.mxu0
    %v339 = vmax.f32 %v265, 0.0
    %v340 = vmax.f32 %v267, 0.0
    %v341 = vmax.f32 %v336, 0.0
    %v344 = vcombine.low %v339, %v340
    %346 = vst [vmem:[#allocation6] sm:$0xff] %v344
    %347 = vst.msk [vmem:[#allocation6 + $0x8] sm:$0xf] %vm37, %v341
    %s348 = scalar_lea.vmem [#allocation3], 12
    %v349 = vld [vmem:[%s348] sm:$0xff]
    %v350 = vld [vmem:[%s348 + $0x8] sm:$0xf]
    %v353 = vcombine.high %v349, %v349
    %355 = vst [vmem:[#allocation2] sm:$0xf] %v349
    %356 = vst [vmem:[#allocation2 + $0x8] sm:$0xf] %v353
    %357 = vst.msk [vmem:[#allocation2 + $0x10] sm:$0xf] %vm37, %v350
    %v358 = vcombine.low %v349, %v349
    %v359 = vcombine.low %v350, %v350
    %360 = vrot.lane.b32.xlu0 %v358, 127
    %v361 = vpop.permute.xlu0 %360
    %362 = vrot.lane.b32.xlu0 %v349, 127
    %v363 = vpop.permute.xlu0 %362
    %364 = vrot.lane.b32.xlu0 %v359, 127
    %v365 = vpop.permute.xlu0 %364
    %v366 = vsel %vm47, %v361, %v363
    %v367 = vsel %vm47, %v363, %v365
    %371 = vst [vmem:[#allocation2] sm:$0xf0] %v366
    %372 = vst [vmem:[#allocation2 + $0x8] sm:$0xf0] %v367
    %373 = vst.msk [vmem:[#allocation2 + $0x10] sm:$0xf0] %vm55, %v365
    %374 = vrot.lane.b32.xlu0 %v349, 126
    %v375 = vpop.permute.xlu0 %374
    %376 = vrot.lane.b32.xlu0 %v353, 126
    %v377 = vpop.permute.xlu0 %376
    %378 = vrot.lane.b32.xlu0 %v350, 126
    %v379 = vpop.permute.xlu0 %378
    %v380 = vsel %vm63, %v375, %v377
    %v381 = vsel %vm63, %v377, %v379
    %385 = vst [vmem:[#allocation2 + $0x18] sm:$0xf] %v380
    %386 = vst [vmem:[#allocation2 + $0x20] sm:$0xf] %v381
    %387 = vst.msk [vmem:[#allocation2 + $0x28] sm:$0xf] %vm37, %v379
    %388 = vrot.lane.b32.xlu0 %v358, 110
    %v389 = vpop.permute.xlu0 %388
    %390 = vrot.lane.b32.xlu0 %v349, 110
    %v391 = vpop.permute.xlu0 %390
    %392 = vrot.lane.b32.xlu0 %v359, 110
    %v393 = vpop.permute.xlu0 %392
    %v394 = vsel %vm78, %v389, %v391
    %v395 = vsel %vm78, %v391, %v393
    %399 = vst [vmem:[#allocation2 + $0x18] sm:$0xf0] %v394
    %400 = vst [vmem:[#allocation2 + $0x20] sm:$0xf0] %v395
    %401 = vst.msk [vmem:[#allocation2 + $0x28] sm:$0xf0] %vm55, %v393
    %402 = vrot.lane.b32.xlu0 %v349, 109
    %v403 = vpop.permute.xlu0 %402
    %404 = vrot.lane.b32.xlu0 %v353, 109
    %v405 = vpop.permute.xlu0 %404
    %406 = vrot.lane.b32.xlu0 %v350, 109
    %v407 = vpop.permute.xlu0 %406
    %v408 = vsel %vm93, %v403, %v405
    %v409 = vsel %vm93, %v405, %v407
    %413 = vst [vmem:[#allocation2 + $0x30] sm:$0xf] %v408
    %414 = vst [vmem:[#allocation2 + $0x38] sm:$0xf] %v409
    %415 = vst.msk [vmem:[#allocation2 + $0x40] sm:$0xf] %vm37, %v407
    %416 = vrot.lane.b32.xlu0 %v358, 108
    %v417 = vpop.permute.xlu0 %416
    %418 = vrot.lane.b32.xlu0 %v349, 108
    %v419 = vpop.permute.xlu0 %418
    %420 = vrot.lane.b32.xlu0 %v359, 108
    %v421 = vpop.permute.xlu0 %420
    %v422 = vsel %vm108, %v417, %v419
    %v423 = vsel %vm108, %v419, %v421
    %427 = vst [vmem:[#allocation2 + $0x30] sm:$0xf0] %v422
    %428 = vst [vmem:[#allocation2 + $0x38] sm:$0xf0] %v423
    %429 = vst.msk [vmem:[#allocation2 + $0x40] sm:$0xf0] %vm55, %v421
    %430 = vrot.lane.b32.xlu0 %v349, 92
    %v431 = vpop.permute.xlu0 %430
    %432 = vrot.lane.b32.xlu0 %v353, 92
    %v433 = vpop.permute.xlu0 %432
    %434 = vrot.lane.b32.xlu0 %v350, 92
    %v435 = vpop.permute.xlu0 %434
    %v436 = vsel %vm123, %v431, %v433
    %v437 = vsel %vm123, %v433, %v435
    %441 = vst [vmem:[#allocation2 + $0x48] sm:$0xf] %v436
    %442 = vst [vmem:[#allocation2 + $0x50] sm:$0xf] %v437
    %443 = vst.msk [vmem:[#allocation2 + $0x58] sm:$0xf] %vm37, %v435
    %444 = vrot.lane.b32.xlu0 %v358, 91
    %v445 = vpop.permute.xlu0 %444
    %446 = vrot.lane.b32.xlu0 %v349, 91
    %v447 = vpop.permute.xlu0 %446
    %448 = vrot.lane.b32.xlu0 %v359, 91
    %v449 = vpop.permute.xlu0 %448
    %v450 = vsel %vm138, %v445, %v447
    %v451 = vsel %vm138, %v447, %v449
    %455 = vst [vmem:[#allocation2 + $0x48] sm:$0xf0] %v450
    %456 = vst [vmem:[#allocation2 + $0x50] sm:$0xf0] %v451
    %457 = vst.msk [vmem:[#allocation2 + $0x58] sm:$0xf0] %vm55, %v449
    %458 = vrot.lane.b32.xlu0 %v349, 90
    %v459 = vpop.permute.xlu0 %458
    %460 = vrot.lane.b32.xlu0 %v353, 90
    %v461 = vpop.permute.xlu0 %460
    %462 = vrot.lane.b32.xlu0 %v350, 90
    %v463 = vpop.permute.xlu0 %462
    %v464 = vsel %vm153, %v459, %v461
    %v465 = vsel %vm153, %v461, %v463
    %469 = vst [vmem:[#allocation2 + $0x60] sm:$0xf] %v464
    %470 = vst [vmem:[#allocation2 + $0x68] sm:$0xf] %v465
    %471 = vst.msk [vmem:[#allocation2 + $0x70] sm:$0xf] %vm37, %v463
    %v472 = vld [vmem:[%s1] sm:$0xf]
    %v473 = vld [vmem:[#allocation2] sm:$0xff]
    %v474 = vld [vmem:[#allocation2 + $0x8] sm:$0xff]
    %v475 = vld [vmem:[#allocation2 + $0x10] sm:$0xff]
    %v476 = vld [vmem:[#allocation2 + $0x18] sm:$0xff]
    %v477 = vld [vmem:[#allocation2 + $0x20] sm:$0xff]
    %v478 = vld [vmem:[#allocation2 + $0x28] sm:$0xff]
    %v479 = vld [vmem:[#allocation2 + $0x30] sm:$0xff]
    %v480 = vld [vmem:[#allocation2 + $0x38] sm:$0xff]
    %v481 = vld [vmem:[#allocation2 + $0x40] sm:$0xff]
    %v482 = vld [vmem:[#allocation2 + $0x48] sm:$0xff]
    %v483 = vld [vmem:[#allocation2 + $0x50] sm:$0xff]
    %v484 = vld [vmem:[#allocation2 + $0x58] sm:$0xff]
    %v485 = vld [vmem:[#allocation2 + $0x60] sm:$0xf]
    %v486 = vld [vmem:[#allocation2 + $0x68] sm:$0xf]
    %v487 = vld [vmem:[#allocation2 + $0x70] sm:$0xf]
    %v488 = vld [vmem:[%s2] sm:$0xf]
    %490 = vset.pattern.permute.xlu0 0
    %491 = vperm.xlu0 %490, %v488
    %v492 = vpop.permute.xlu0 %491
    %v495 = vsel %vm184, %v472, 0
    %v498 = vsel %vm188, %v485, 0
    %v501 = vsel %vm188, %v486, 0
    %v504 = vsel %vm188, %v487, 0
    %506 = vmatprep.subr.mxu0 %v474
    %507 = vmatpush1.msra.mxu0 %v473
    %508 = vmatprep.subr.mxu0 %v477
    %509 = vmatpush1.msra.mxu0 %v476
    %510 = vmatprep.subr.mxu0 %v480
    %511 = vmatpush1.msra.mxu0 %v479
    %512 = vmatprep.subr.mxu0 %v483
    %513 = vmatpush1.msra.mxu0 %v482
    %514 = vmatprep.subr.mxu0 %v501
    %515 = vmatpush1.msra.mxu0 %v498
    %516 = vmatprep.subr.mxu0 0.0
    %517 = vmatpush1.msra.mxu0 0.0
    %518 = vmatprep.subr.mxu0 0.0
    %519 = vmatpush1.msra.mxu0 0.0
    %520 = vmatprep.subr.mxu0 0.0
    %521 = vmatpush1.msra.mxu0 0.0
    %522 = vmatprep.subr.mxu0 0.0
    %523 = vmatpush1.msra.mxu0 0.0
    %524 = vmatprep.subr.mxu0 0.0
    %525 = vmatpush1.msra.mxu0 0.0
    %526 = vmatprep.subr.mxu0 0.0
    %527 = vmatpush1.msra.mxu0 0.0
    %528 = vmatprep.subr.mxu0 0.0
    %529 = vmatpush1.msra.mxu0 0.0
    %530 = vmatprep.subr.mxu0 0.0
    %531 = vmatpush1.msra.mxu0 0.0
    %532 = vmatprep.subr.mxu0 0.0
    %533 = vmatpush1.msra.mxu0 0.0
    %534 = vmatprep.subr.mxu0 0.0
    %535 = vmatpush1.msra.mxu0 0.0
    %536 = vmatprep.subr.mxu0 0.0
    %537 = vmatpush1.msra.mxu0 0.0
    %538 = vmatprep.subr.mxu0 0.0
    %539 = vmatpush1.msra.mxu0 0.0
    %540 = vmatprep.subr.mxu0 0.0
    %541 = vmatpush1.msra.mxu0 0.0
    %542 = vmatprep.subr.mxu0 0.0
    %543 = vmatpush1.msra.mxu0 0.0
    %544 = vmatprep.subr.mxu0 0.0
    %545 = vmatpush1.msra.mxu0 0.0
    %546 = vmatprep.subr.mxu0 0.0
    %547 = vmatpush1.msra.mxu0 0.0
    %548 = vmatprep.subr.mxu0 0.0
    %549 = vmatpush1.msra.mxu0 0.0
    %550 = vmatprep.subr.mxu0 0.0
    %551 = vmatpush1.msra.mxu0 0.0
    %552 = vmatprep.subr.mxu0 0.0
    %553 = vmatpush1.msra.mxu0 0.0
    %554 = vmatprep.subr.mxu0 0.0
    %555 = vmatpush1.msra.mxu0 0.0
    %556 = vmatprep.subr.mxu0 0.0
    %557 = vmatpush1.msra.mxu0 0.0
    %558 = vmatprep.subr.mxu0 0.0
    %559 = vmatpush1.msra.mxu0 0.0
    %560 = vmatprep.subr.mxu0 0.0
    %561 = vmatpush1.msra.mxu0 0.0
    %562 = vmatprep.subr.mxu0 0.0
    %563 = vmatpush1.msra.mxu0 0.0
    %564 = vmatprep.subr.mxu0 0.0
    %565 = vmatpush1.msra.mxu0 0.0
    %566 = vmatprep.subr.mxu0 0.0
    %567 = vmatpush1.msra.mxu0 0.0
    %568 = vmatprep.subr.mxu0 0.0
    %569 = vmatpush1.msra.mxu0 0.0
    %570 = vmatprep.mubr.f32.mxu0 0.0
    %571 = vmatmul.mubr.f32.gmra.mrb[0].mxu0 %v495
    %v572 = vpop.f32.mrb[0].mxu0
    %v573 = vadd.f32 %v492, %v572
    %v574 = vpop.f32.mrb[0].mxu0
    %v575 = vadd.f32 %v492, %v574
    %576 = vdwg.mxu0
    %577 = vmatprep.subr.mxu0 0.0
    %578 = vmatpush1.msra.mxu0 %v475
    %579 = vmatprep.subr.mxu0 0.0
    %580 = vmatpush1.msra.mxu0 %v478
    %581 = vmatprep.subr.mxu0 0.0
    %582 = vmatpush1.msra.mxu0 %v481
    %583 = vmatprep.subr.mxu0 0.0
    %584 = vmatpush1.msra.mxu0 %v484
    %585 = vmatprep.subr.mxu0 0.0
    %586 = vmatpush1.msra.mxu0 %v504
    %587 = vmatprep.subr.mxu0 0.0
    %588 = vmatpush1.msra.mxu0 0.0
    %589 = vmatprep.subr.mxu0 0.0
    %590 = vmatpush1.msra.mxu0 0.0
    %591 = vmatprep.subr.mxu0 0.0
    %592 = vmatpush1.msra.mxu0 0.0
    %593 = vmatprep.subr.mxu0 0.0
    %594 = vmatpush1.msra.mxu0 0.0
    %595 = vmatprep.subr.mxu0 0.0
    %596 = vmatpush1.msra.mxu0 0.0
    %597 = vmatprep.subr.mxu0 0.0
    %598 = vmatpush1.msra.mxu0 0.0
    %599 = vmatprep.subr.mxu0 0.0
    %600 = vmatpush1.msra.mxu0 0.0
    %601 = vmatprep.subr.mxu0 0.0
    %602 = vmatpush1.msra.mxu0 0.0
    %603 = vmatprep.subr.mxu0 0.0
    %604 = vmatpush1.msra.mxu0 0.0
    %605 = vmatprep.subr.mxu0 0.0
    %606 = vmatpush1.msra.mxu0 0.0
    %607 = vmatprep.subr.mxu0 0.0
    %608 = vmatpush1.msra.mxu0 0.0
    %609 = vmatprep.subr.mxu0 0.0
    %610 = vmatpush1.msra.mxu0 0.0
    %611 = vmatprep.subr.mxu0 0.0
    %612 = vmatpush1.msra.mxu0 0.0
    %613 = vmatprep.subr.mxu0 0.0
    %614 = vmatpush1.msra.mxu0 0.0
    %615 = vmatprep.subr.mxu0 0.0
    %616 = vmatpush1.msra.mxu0 0.0
    %617 = vmatprep.subr.mxu0 0.0
    %618 = vmatpush1.msra.mxu0 0.0
    %619 = vmatprep.subr.mxu0 0.0
    %620 = vmatpush1.msra.mxu0 0.0
    %621 = vmatprep.subr.mxu0 0.0
    %622 = vmatpush1.msra.mxu0 0.0
    %623 = vmatprep.subr.mxu0 0.0
    %624 = vmatpush1.msra.mxu0 0.0
    %625 = vmatprep.subr.mxu0 0.0
    %626 = vmatpush1.msra.mxu0 0.0
    %627 = vmatprep.subr.mxu0 0.0
    %628 = vmatpush1.msra.mxu0 0.0
    %629 = vmatprep.subr.mxu0 0.0
    %630 = vmatpush1.msra.mxu0 0.0
    %631 = vmatprep.subr.mxu0 0.0
    %632 = vmatpush1.msra.mxu0 0.0
    %633 = vmatprep.subr.mxu0 0.0
    %634 = vmatpush1.msra.mxu0 0.0
    %635 = vmatprep.subr.mxu0 0.0
    %636 = vmatpush1.msra.mxu0 0.0
    %637 = vmatprep.subr.mxu0 0.0
    %638 = vmatpush1.msra.mxu0 0.0
    %639 = vmatprep.subr.mxu0 0.0
    %640 = vmatpush1.msra.mxu0 0.0
    %641 = vmatprep.mubr.f32.mxu0 0.0
    %642 = vmatmul.mubr.f32.gmra.mrb[0].mxu0 %v495
    %v643 = vpop.f32.mrb[0].mxu0
    %v644 = vadd.f32 %v492, %v643
    %v645 = vpop.f32.mrb[0].mxu0
    %646 = vdwg.mxu0
    %v647 = vmax.f32 %v573, 0.0
    %v648 = vmax.f32 %v575, 0.0
    %v649 = vmax.f32 %v644, 0.0
    %v652 = vcombine.low %v647, %v648
    %s654 = scalar_lea.vmem [#allocation6], 12
    %655 = vst [vmem:[%s654] sm:$0xff] %v652
    %656 = vst.msk [vmem:[%s654 + $0x8] sm:$0xf] %vm37, %v649
    // Predicated region
    $region18: #{tpu_custom_call.1} parent=1 // pred_check
      _
    $region19: #{tpu_custom_call.1} parent=1 // pred_check_branch
      %658 = sbr.rel (0) target = $region21
    $region20: #{tpu_custom_call.1} parent=1 // pred_region
      %s660 = ssub.s32 384, 384
      %661 = vsyncadd [#allocation5], %s660
      %s662 = sshll.u32 [#allocation6], 4
      %s663 = int_to_ptr.vmem [resolvable:$true] %s662
      %668 = dma.vmem_to_hbm [thread:$0]  %s663, 384, %s3, [#allocation5], 192, 192, 12
    $region21: #{tpu_custom_call.1} parent=1 // pred_fallthru
      _
    // Predicated region
    $region22: #{tpu_custom_call.1} parent=1 // pred_check
      _
    $region23: #{tpu_custom_call.1} parent=1 // pred_check_branch
      %670 = sbr.rel (0) target = $region25
    $region24: #{tpu_custom_call.1} parent=1 // pred_region
      %671 = dma.done [#allocation5], 384
    $region25: #{tpu_custom_call.1} parent=1 // pred_fallthru
      _
    %672 = vsyncpa [#allocation4], 1
    %673 = vsyncpa [#allocation5], 1

</llo_original>
